<compile_context>
chip_gen: v6e
topology: v6e:2x2x1
jax: 0.10.0
libtpu: 0.0.40
codegen_flags: <defaults>
</compile_context>

<pallas_src>
import functools

import jax
import jax.numpy as jnp
from jax.experimental import pallas as pl
from jax.experimental.pallas import tpu as pltpu


def _leaky_relu(x, slope=0.2):
    return jnp.where(x > 0, x, slope * x)


def _round_up(v, m):
    return ((v + m - 1) // m) * m


def gcl_rf_vel_kernel(xr_ref, xc_ref, ea_ref, row_ref,
                      x_ref, vel_ref, vnorm_ref, deg_ref,
                      w1r_ref, w1a_ref, b1_ref, w2_ref,
                      wv1_ref, bv1_ref, wv2_ref, bv2_ref,
                      out_ref, acc_ref, *, coords_weight):
    n = pl.program_id(0)            # node-tile index  ("parallel")
    e = pl.program_id(1)            # edge-tile index  ("arbitrary" reduction)
    te = row_ref.shape[0]
    tn = acc_ref.shape[1]

    @pl.when(e == 0)
    def _():
        acc_ref[...] = jnp.zeros_like(acc_ref)

    # ---- edge_model on this E tile (feature-major: E on lanes) ------------
    diff = xr_ref[...] - xc_ref[...]                                    # (D, TE)
    radial = jnp.sqrt(jnp.sum(diff * diff, axis=0, keepdims=True))      # (1, TE)

    # phi: Linear(1+A -> NF) ; LeakyReLU(0.2) ; Linear(NF -> 1, bias-free) ; Tanh
    # radial term is a depth-1 contraction -> VPU broadcast, not an MXU matmul.
    h = w1r_ref[...] * radial + b1_ref[...]                             # (NF, TE)
    h = h + jnp.dot(w1a_ref[...], ea_ref[...],
                    preferred_element_type=jnp.float32)                 # (NF, TE)
    h = _leaky_relu(h)
    e_out = jnp.tanh(jnp.sum(h * w2_ref[...], axis=0, keepdims=True))   # (1, TE)
    m_ij = diff * e_out                                                 # (D, TE)

    # ---- scatter-add into this node tile: one-hot matmul on the MXU -------
    # Lane-dense TN-wide output.  Padded edges carry row = -1 -> all-zero
    # one-hot rows, so they contribute nothing.
    node_ids = jax.lax.broadcasted_iota(jnp.int32, (te, tn), 1) + n * tn
    onehot = (node_ids == row_ref[...]).astype(jnp.float32)             # (TE, TN)
    acc_ref[...] += jnp.dot(m_ij, onehot,
                            preferred_element_type=jnp.float32)         # (D, TN)
    # TODO(synk): for large N, replace the O(E*N) one-hot matmul with a
    # sorted-segment reduction using PrefetchScalarGridSpec offsets (O(E*D)).

    # ---- finalize on the last E tile: mean, coords_weight, velocity term --
    @pl.when(e == pl.num_programs(1) - 1)
    def _():
        inv_cnt = coords_weight / jnp.maximum(deg_ref[...], 1.0)        # (1, TN)
        x_new = x_ref[...] + acc_ref[...] * inv_cnt                     # (D, TN)

        hv = _leaky_relu(wv1_ref[...] * vnorm_ref[...] + bv1_ref[...])  # (NF, TN)
        vscale = (jnp.sum(hv * wv2_ref[...], axis=0, keepdims=True)
                  + bv2_ref[...])                                       # (1, TN)
        out_ref[...] = (x_new + vel_ref[...] * vscale).astype(out_ref.dtype)


def gcl_rf_vel_forward(x, vel_norm, vel, edge_index, edge_attr, params,
                       coords_weight=1.0, tn=256, te=512):
    row, col = edge_index
    N, D = x.shape
    E = row.shape[0]
    A = edge_attr.shape[1]

    # Lane axes must be multiples of 128; clamp tiles to the padded problem so
    # tiny graphs run as a single small tile.
    tn = _round_up(min(tn, _round_up(N, 128)), 128)
    te = _round_up(min(te, _round_up(E, 128)), 128)
    n_pad = _round_up(N, tn)
    e_pad = _round_up(E, te)

    # Index-only JAX glue (gather + degree); everything else runs in-kernel.
    xr = x[row]
    xc = x[col]
    deg = jnp.zeros((N,), jnp.float32).at[row].add(1.0)

    def pad_e(a_t):   # (F, E) -> (F, e_pad)
        return jnp.pad(a_t, ((0, 0), (0, e_pad - E)))

    def pad_n(a_t):   # (F, N) -> (F, n_pad)
        return jnp.pad(a_t, ((0, 0), (0, n_pad - N)))

    # feature-major (lane-dense) layouts
    xr_t = pad_e(xr.T.astype(jnp.float32))            # (D, e_pad)
    xc_t = pad_e(xc.T.astype(jnp.float32))
    ea_t = pad_e(edge_attr.T.astype(jnp.float32))     # (A, e_pad)
    row2 = jnp.pad(row.astype(jnp.int32), (0, e_pad - E),
                   constant_values=-1).reshape(e_pad, 1)

    x_t = pad_n(x.T.astype(jnp.float32))              # (D, n_pad)
    vel_t = pad_n(vel.T.astype(jnp.float32))
    vn_t = pad_n(vel_norm.T.astype(jnp.float32))      # (1, n_pad)
    deg_t = pad_n(deg.reshape(1, N))                  # (1, n_pad)

    (w1r, w1a, b1, w2, wv1, bv1, wv2, bv2) = params
    nf = w2.shape[0]
    w1r_t, w1a_t, b1_t = w1r.T, w1a.T, b1.T           # (NF,1) (NF,A) (NF,1)
    wv1_t, bv1_t = wv1.T, bv1.T                       # (NF,1) (NF,1)

    grid = (n_pad // tn, e_pad // te)

    def edge_spec(f):
        return pl.BlockSpec((f, te), lambda n, e: (0, e))

    def node_spec(f):
        return pl.BlockSpec((f, tn), lambda n, e: (0, n))

    def full_spec(shape):
        return pl.BlockSpec(shape, lambda n, e: (0, 0))

    out_t = pl.pallas_call(
        functools.partial(gcl_rf_vel_kernel, coords_weight=coords_weight),
        out_shape=jax.ShapeDtypeStruct((D, n_pad), jnp.float32),
        grid_spec=pltpu.PrefetchScalarGridSpec(
            num_scalar_prefetch=0,
            grid=grid,
            in_specs=[
                edge_spec(D), edge_spec(D), edge_spec(A),
                pl.BlockSpec((te, 1), lambda n, e: (e, 0)),
                node_spec(D), node_spec(D), node_spec(1), node_spec(1),
                full_spec((nf, 1)), full_spec((nf, A)), full_spec((nf, 1)),
                full_spec((nf, 1)),
                full_spec((nf, 1)), full_spec((nf, 1)), full_spec((nf, 1)),
                full_spec((1, 1)),
            ],
            out_specs=node_spec(D),
            scratch_shapes=[pltpu.VMEM((D, tn), jnp.float32)],
        ),
        compiler_params=pltpu.CompilerParams(
            dimension_semantics=("parallel", "arbitrary"),
            vmem_limit_bytes=32 * 1024 * 1024,
        ),
    )(xr_t, xc_t, ea_t, row2,
      x_t, vel_t, vn_t, deg_t,
      w1r_t, w1a_t, b1_t, w2,
      wv1_t, bv1_t, wv2, bv2)

    return out_t[:, :N].T, edge_attr


def init_params(key, nf=32, edge_attr_nf=2):
    ks = jax.random.split(key, 8)
    in_phi = 1 + edge_attr_nf
    # phi: Linear(1+A, nf) + bias ; Linear(nf, 1, bias=False) xavier gain=0.001
    w1 = jax.random.uniform(ks[0], (in_phi, nf), jnp.float32, -1.0, 1.0) / jnp.sqrt(in_phi)
    b1 = jax.random.uniform(ks[1], (1, nf), jnp.float32, -1.0, 1.0) / jnp.sqrt(in_phi)
    gain = 0.001
    bound = gain * jnp.sqrt(6.0 / (nf + 1))
    w2 = jax.random.uniform(ks[2], (nf, 1), jnp.float32, -bound, bound)
    # coord_mlp_vel: Linear(1, nf) ; LeakyReLU(0.2) ; Linear(nf, 1)
    wv1 = jax.random.uniform(ks[3], (1, nf), jnp.float32, -1.0, 1.0)
    bv1 = jax.random.uniform(ks[4], (1, nf), jnp.float32, -1.0, 1.0)
    wv2 = jax.random.uniform(ks[5], (nf, 1), jnp.float32, -1.0, 1.0) / jnp.sqrt(nf)
    bv2 = jax.random.uniform(ks[6], (1, 1), jnp.float32, -1.0, 1.0) / jnp.sqrt(nf)
    w1r, w1a = w1[:1, :], w1[1:, :]
    return (w1r, w1a, b1, w2, wv1, bv1, wv2, bv2)


def reference_forward(x, vel_norm, vel, edge_index, edge_attr, params,
                      coords_weight=1.0):
    """Pure-JAX reference mirroring the PyTorch module exactly."""
    (w1r, w1a, b1, w2, wv1, bv1, wv2, bv2) = params
    row, col = edge_index
    diff = x[row] - x[col]
    radial = jnp.sqrt(jnp.sum(diff ** 2, axis=1, keepdims=True))
    e_in = jnp.concatenate([radial, edge_attr], axis=1)
    w1 = jnp.concatenate([w1r, w1a], axis=0)
    h = _leaky_relu(e_in @ w1 + b1)
    e_out = jnp.tanh(h @ w2)
    m = diff * e_out
    N = x.shape[0]
    summ = jnp.zeros((N, x.shape[1]), jnp.float32).at[row].add(m)
    count = jnp.zeros((N, x.shape[1]), jnp.float32).at[row].add(jnp.ones_like(m))
    agg = summ / jnp.maximum(count, 1.0)
    x_new = x + agg * coords_weight
    vscale = _leaky_relu(vel_norm @ wv1 + bv1) @ wv2 + bv2
    return x_new + vel * vscale, edge_attr


if __name__ == "__main__":
    key = jax.random.PRNGKey(0)
    k_x, k_v, k_e, k_p, k_r = jax.random.split(key, 5)

    N, D = 8, 3          # nodes, coordinate dim
    E = 16               # edges
    NF = 32              # hidden width of both MLPs
    A = 2                # edge_attr_nf

    x = jax.random.normal(k_x, (N, D), jnp.float32)
    vel = jax.random.normal(k_v, (N, D), jnp.float32)
    vel_norm = jnp.sqrt(jnp.sum(vel ** 2, axis=1, keepdims=True))
    edge_attr = jax.random.normal(k_e, (E, A), jnp.float32)
    row = jax.random.randint(k_r, (E,), 0, N, jnp.int32)
    col = (row + 1 + jax.random.randint(jax.random.fold_in(k_r, 1), (E,), 0, N - 1,
                                        jnp.int32)) % N
    edge_index = (row, col)

    params = init_params(k_p, nf=NF, edge_attr_nf=A)

    out, ea_out = gcl_rf_vel_forward(x, vel_norm, vel, edge_index, edge_attr,
                                     params, coords_weight=1.0)
    out = jax.block_until_ready(out)

    ref, _ = reference_forward(x, vel_norm, vel, edge_index, edge_attr,
                               params, coords_weight=1.0)
    assert jnp.allclose(out, ref, atol=1e-5, rtol=1e-5), (out, ref)

    print("KERNEL_OK")
</pallas_src>

<mosaic_0001>
module attributes {stable_mosaic.version = 11 : i64} {
  func.func @gcl_rf_vel_kernel(%arg0: i32, %arg1: i32, %arg2: memref<3x128xf32, #tpu.memory_space<vmem>>, %arg3: memref<3x128xf32, #tpu.memory_space<vmem>>, %arg4: memref<2x128xf32, #tpu.memory_space<vmem>>, %arg5: memref<128x1xi32, #tpu.memory_space<vmem>>, %arg6: memref<3x128xf32, #tpu.memory_space<vmem>>, %arg7: memref<3x128xf32, #tpu.memory_space<vmem>>, %arg8: memref<1x128xf32, #tpu.memory_space<vmem>>, %arg9: memref<1x128xf32, #tpu.memory_space<vmem>>, %arg10: memref<32x1xf32, #tpu.memory_space<vmem>>, %arg11: memref<32x2xf32, #tpu.memory_space<vmem>>, %arg12: memref<32x1xf32, #tpu.memory_space<vmem>>, %arg13: memref<32x1xf32, #tpu.memory_space<vmem>>, %arg14: memref<32x1xf32, #tpu.memory_space<vmem>>, %arg15: memref<32x1xf32, #tpu.memory_space<vmem>>, %arg16: memref<32x1xf32, #tpu.memory_space<vmem>>, %arg17: memref<1x1xf32, #tpu.memory_space<vmem>>, %arg18: memref<3x128xf32, #tpu.memory_space<vmem>>, %arg19: memref<3x128xf32, #tpu.memory_space<vmem>>) attributes {dimension_semantics = [#tpu.dimension_semantics<parallel>, #tpu.dimension_semantics<arbitrary>], iteration_bounds = array<i64: 1, 1>, scalar_prefetch = 0 : i64, scratch_operands = 1 : i64, tpu.core_type = #tpu.core_type<tc>, window_params = [{transform_indices = @transform_0, window_bounds = array<i64: 3, 128>}, {transform_indices = @transform_1, window_bounds = array<i64: 3, 128>}, {transform_indices = @transform_2, window_bounds = array<i64: 2, 128>}, {transform_indices = @transform_3, window_bounds = array<i64: 128, 1>}, {transform_indices = @transform_4, window_bounds = array<i64: 3, 128>}, {transform_indices = @transform_5, window_bounds = array<i64: 3, 128>}, {transform_indices = @transform_6, window_bounds = array<i64: 1, 128>}, {transform_indices = @transform_7, window_bounds = array<i64: 1, 128>}, {pipeline_mode = #tpu.pipeline_mode<synchronous>, transform_indices = @transform_8, window_bounds = array<i64: 32, 1>}, {pipeline_mode = #tpu.pipeline_mode<synchronous>, transform_indices = @transform_9, window_bounds = array<i64: 32, 2>}, {pipeline_mode = #tpu.pipeline_mode<synchronous>, transform_indices = @transform_10, window_bounds = array<i64: 32, 1>}, {pipeline_mode = #tpu.pipeline_mode<synchronous>, transform_indices = @transform_11, window_bounds = array<i64: 32, 1>}, {pipeline_mode = #tpu.pipeline_mode<synchronous>, transform_indices = @transform_12, window_bounds = array<i64: 32, 1>}, {pipeline_mode = #tpu.pipeline_mode<synchronous>, transform_indices = @transform_13, window_bounds = array<i64: 32, 1>}, {pipeline_mode = #tpu.pipeline_mode<synchronous>, transform_indices = @transform_14, window_bounds = array<i64: 32, 1>}, {pipeline_mode = #tpu.pipeline_mode<synchronous>, transform_indices = @transform_15, window_bounds = array<i64: 1, 1>}, {transform_indices = @transform_16, window_bounds = array<i64: 3, 128>}]} {
    %c0_i32 = arith.constant 0 : i32
    %0 = arith.cmpi eq, %arg1, %c0_i32 : i32
    %1 = arith.extui %0 : i1 to i32
    %c0_i32_0 = arith.constant 0 : i32
    %2 = arith.cmpi ne, %1, %c0_i32_0 : i32
    scf.if %2 {
      %cst_27 = arith.constant 0.000000e+00 : f32
      %50 = vector.broadcast %cst_27 : f32 to vector<3x128xf32>
      %c0_28 = arith.constant 0 : index
      %c0_29 = arith.constant 0 : index
      %51 = vector.load %arg19[%c0_28, %c0_29] : memref<3x128xf32, #tpu.memory_space<vmem>>, vector<3x128xf32>
      tpu.vector_store %arg19[%c0_28, %c0_29], %50 {strides = array<i32>} : memref<3x128xf32, #tpu.memory_space<vmem>>, vector<3x128xf32>,
    } else {
    }
    %c0 = arith.constant 0 : index
    %c0_1 = arith.constant 0 : index
    %3 = vector.load %arg2[%c0, %c0_1] : memref<3x128xf32, #tpu.memory_space<vmem>>, vector<3x128xf32>
    %c0_2 = arith.constant 0 : index
    %c0_3 = arith.constant 0 : index
    %4 = vector.load %arg3[%c0_2, %c0_3] : memref<3x128xf32, #tpu.memory_space<vmem>>, vector<3x128xf32>
    %5 = arith.subf %3, %4 : vector<3x128xf32>
    %6 = arith.mulf %5, %5 : vector<3x128xf32>
    %cst = arith.constant dense<0.000000e+00> : vector<128xf32>
    %7 = vector.multi_reduction <add>, %6, %cst [0] : vector<3x128xf32> to vector<128xf32>
    %8 = vector.shape_cast %7 : vector<128xf32> to vector<1x128xf32>
    %9 = math.sqrt %8 : vector<1x128xf32>
    %c0_4 = arith.constant 0 : index
    %c0_5 = arith.constant 0 : index
    %10 = vector.load %arg10[%c0_4, %c0_5] : memref<32x1xf32, #tpu.memory_space<vmem>>, vector<32x1xf32>
    %11 = vector.broadcast %10 : vector<32x1xf32> to vector<32x128xf32>
    %12 = vector.broadcast %9 : vector<1x128xf32> to vector<32x128xf32>
    %13 = arith.mulf %11, %12 : vector<32x128xf32>
    %c0_6 = arith.constant 0 : index
    %c0_7 = arith.constant 0 : index
    %14 = vector.load %arg12[%c0_6, %c0_7] : memref<32x1xf32, #tpu.memory_space<vmem>>, vector<32x1xf32>
    %15 = vector.broadcast %14 : vector<32x1xf32> to vector<32x128xf32>
    %16 = arith.addf %13, %15 : vector<32x128xf32>
    %c0_8 = arith.constant 0 : index
    %c0_9 = arith.constant 0 : index
    %17 = vector.load %arg11[%c0_8, %c0_9] : memref<32x2xf32, #tpu.memory_space<vmem>>, vector<32x2xf32>
    %c0_10 = arith.constant 0 : index
    %c0_11 = arith.constant 0 : index
    %18 = vector.load %arg4[%c0_10, %c0_11] : memref<2x128xf32, #tpu.memory_space<vmem>>, vector<2x128xf32>
    %cst_12 = arith.constant dense<0.000000e+00> : vector<32x128xf32>
    %19 = tpu.matmul %17, %18, %cst_12 {dimension_numbers = #tpu.dot_dimension_numbers<[1], [0], [0], [1], [0, 0, 1, 1], [], []>} : vector<32x2xf32>, vector<2x128xf32>, vector<32x128xf32> -> vector<32x128xf32>
    %20 = arith.addf %16, %19 : vector<32x128xf32>
    %cst_13 = arith.constant 0.000000e+00 : f32
    %21 = vector.broadcast %cst_13 : f32 to vector<32x128xf32>
    %22 = arith.cmpf ogt, %20, %21 : vector<32x128xf32>
    %cst_14 = arith.constant 2.000000e-01 : f32
    %23 = vector.broadcast %cst_14 : f32 to vector<32x128xf32>
    %24 = arith.mulf %23, %20 : vector<32x128xf32>
    %25 = arith.select %22, %20, %24 : vector<32x128xi1>, vector<32x128xf32>
    %c0_15 = arith.constant 0 : index
    %c0_16 = arith.constant 0 : index
    %26 = vector.load %arg13[%c0_15, %c0_16] : memref<32x1xf32, #tpu.memory_space<vmem>>, vector<32x1xf32>
    %27 = vector.broadcast %26 : vector<32x1xf32> to vector<32x128xf32>
    %28 = arith.mulf %25, %27 : vector<32x128xf32>
    %cst_17 = arith.constant dense<0.000000e+00> : vector<128xf32>
    %29 = vector.multi_reduction <add>, %28, %cst_17 [0] : vector<32x128xf32> to vector<128xf32>
    %30 = vector.shape_cast %29 : vector<128xf32> to vector<1x128xf32>
    %31 = math.tanh %30 : vector<1x128xf32>
    %32 = vector.broadcast %31 : vector<1x128xf32> to vector<3x128xf32>
    %33 = arith.mulf %5, %32 : vector<3x128xf32>
    %34 = tpu.iota {dimensions = array<i32: 1>} : vector<128x128xi32>
    %c128_i32 = arith.constant 128 : i32
    %35 = arith.muli %arg0, %c128_i32 : i32
    %36 = vector.broadcast %35 : i32 to vector<128x128xi32>
    %37 = arith.addi %34, %36 : vector<128x128xi32>
    %c0_18 = arith.constant 0 : index
    %c0_19 = arith.constant 0 : index
    %38 = vector.load %arg5[%c0_18, %c0_19] : memref<128x1xi32, #tpu.memory_space<vmem>>, vector<128x1xi32>
    %39 = vector.broadcast %38 : vector<128x1xi32> to vector<128x128xi32>
    %40 = arith.cmpi eq, %37, %39 : vector<128x128xi32>
    %41 = arith.extui %40 : vector<128x128xi1> to vector<128x128xi32>
    %42 = arith.sitofp %41 : vector<128x128xi32> to vector<128x128xf32>
    %c0_20 = arith.constant 0 : index
    %c0_21 = arith.constant 0 : index
    %43 = vector.load %arg19[%c0_20, %c0_21] : memref<3x128xf32, #tpu.memory_space<vmem>>, vector<3x128xf32>
    %cst_22 = arith.constant dense<0.000000e+00> : vector<3x128xf32>
    %44 = tpu.matmul %33, %42, %cst_22 {dimension_numbers = #tpu.dot_dimension_numbers<[1], [0], [0], [1], [0, 0, 1, 1], [], []>} : vector<3x128xf32>, vector<128x128xf32>, vector<3x128xf32> -> vector<3x128xf32>
    %45 = arith.addf %43, %44 : vector<3x128xf32>
    %c0_23 = arith.constant 0 : index
    %c0_24 = arith.constant 0 : index
    %46 = vector.load %arg19[%c0_23, %c0_24] : memref<3x128xf32, #tpu.memory_space<vmem>>, vector<3x128xf32>
    tpu.vector_store %arg19[%c0_23, %c0_24], %45 {strides = array<i32>} : memref<3x128xf32, #tpu.memory_space<vmem>>, vector<3x128xf32>,
    %c0_i32_25 = arith.constant 0 : i32
    %47 = arith.cmpi eq, %arg1, %c0_i32_25 : i32
    %48 = arith.extui %47 : i1 to i32
    %c0_i32_26 = arith.constant 0 : i32
    %49 = arith.cmpi ne, %48, %c0_i32_26 : i32
    scf.if %49 {
      %c0_27 = arith.constant 0 : index
      %c0_28 = arith.constant 0 : index
      %50 = vector.load %arg9[%c0_27, %c0_28] : memref<1x128xf32, #tpu.memory_space<vmem>>, vector<1x128xf32>
      %cst_29 = arith.constant 1.000000e+00 : f32
      %51 = vector.broadcast %cst_29 : f32 to vector<1x128xf32>
      %52 = arith.maximumf %50, %51 : vector<1x128xf32>
      %cst_30 = arith.constant 1.000000e+00 : f32
      %53 = vector.broadcast %cst_30 : f32 to vector<1x128xf32>
      %54 = arith.divf %53, %52 : vector<1x128xf32>
      %c0_31 = arith.constant 0 : index
      %c0_32 = arith.constant 0 : index
      %55 = vector.load %arg6[%c0_31, %c0_32] : memref<3x128xf32, #tpu.memory_space<vmem>>, vector<3x128xf32>
      %c0_33 = arith.constant 0 : index
      %c0_34 = arith.constant 0 : index
      %56 = vector.load %arg19[%c0_33, %c0_34] : memref<3x128xf32, #tpu.memory_space<vmem>>, vector<3x128xf32>
      %57 = vector.broadcast %54 : vector<1x128xf32> to vector<3x128xf32>
      %58 = arith.mulf %56, %57 : vector<3x128xf32>
      %59 = arith.addf %55, %58 : vector<3x128xf32>
      %c0_35 = arith.constant 0 : index
      %c0_36 = arith.constant 0 : index
      %60 = vector.load %arg14[%c0_35, %c0_36] : memref<32x1xf32, #tpu.memory_space<vmem>>, vector<32x1xf32>
      %c0_37 = arith.constant 0 : index
      %c0_38 = arith.constant 0 : index
      %61 = vector.load %arg8[%c0_37, %c0_38] : memref<1x128xf32, #tpu.memory_space<vmem>>, vector<1x128xf32>
      %62 = vector.broadcast %60 : vector<32x1xf32> to vector<32x128xf32>
      %63 = vector.broadcast %61 : vector<1x128xf32> to vector<32x128xf32>
      %64 = arith.mulf %62, %63 : vector<32x128xf32>
      %c0_39 = arith.constant 0 : index
      %c0_40 = arith.constant 0 : index
      %65 = vector.load %arg15[%c0_39, %c0_40] : memref<32x1xf32, #tpu.memory_space<vmem>>, vector<32x1xf32>
      %66 = vector.broadcast %65 : vector<32x1xf32> to vector<32x128xf32>
      %67 = arith.addf %64, %66 : vector<32x128xf32>
      %cst_41 = arith.constant 0.000000e+00 : f32
      %68 = vector.broadcast %cst_41 : f32 to vector<32x128xf32>
      %69 = arith.cmpf ogt, %67, %68 : vector<32x128xf32>
      %cst_42 = arith.constant 2.000000e-01 : f32
      %70 = vector.broadcast %cst_42 : f32 to vector<32x128xf32>
      %71 = arith.mulf %70, %67 : vector<32x128xf32>
      %72 = arith.select %69, %67, %71 : vector<32x128xi1>, vector<32x128xf32>
      %c0_43 = arith.constant 0 : index
      %c0_44 = arith.constant 0 : index
      %73 = vector.load %arg16[%c0_43, %c0_44] : memref<32x1xf32, #tpu.memory_space<vmem>>, vector<32x1xf32>
      %74 = vector.broadcast %73 : vector<32x1xf32> to vector<32x128xf32>
      %75 = arith.mulf %72, %74 : vector<32x128xf32>
      %cst_45 = arith.constant dense<0.000000e+00> : vector<128xf32>
      %76 = vector.multi_reduction <add>, %75, %cst_45 [0] : vector<32x128xf32> to vector<128xf32>
      %77 = vector.shape_cast %76 : vector<128xf32> to vector<1x128xf32>
      %c0_46 = arith.constant 0 : index
      %c0_47 = arith.constant 0 : index
      %78 = vector.load %arg17[%c0_46, %c0_47] : memref<1x1xf32, #tpu.memory_space<vmem>>, vector<1x1xf32>
      %79 = vector.broadcast %78 : vector<1x1xf32> to vector<1x128xf32>
      %80 = arith.addf %77, %79 : vector<1x128xf32>
      %c0_48 = arith.constant 0 : index
      %c0_49 = arith.constant 0 : index
      %81 = vector.load %arg7[%c0_48, %c0_49] : memref<3x128xf32, #tpu.memory_space<vmem>>, vector<3x128xf32>
      %82 = vector.broadcast %80 : vector<1x128xf32> to vector<3x128xf32>
      %83 = arith.mulf %81, %82 : vector<3x128xf32>
      %84 = arith.addf %59, %83 : vector<3x128xf32>
      %c0_50 = arith.constant 0 : index
      %c0_51 = arith.constant 0 : index
      %85 = vector.load %arg18[%c0_50, %c0_51] : memref<3x128xf32, #tpu.memory_space<vmem>>, vector<3x128xf32>
      tpu.vector_store %arg18[%c0_50, %c0_51], %84 {strides = array<i32>} : memref<3x128xf32, #tpu.memory_space<vmem>>, vector<3x128xf32>,
    } else {
    }
    return
  }
  func.func @transform_0(%arg0: i32, %arg1: i32) -> (i32, i32) {
    %c0_i32 = arith.constant 0 : i32
    %c0_i32_0 = arith.constant 0 : i32
    return %c0_i32, %arg1 : i32, i32
  }
  func.func @transform_1(%arg0: i32, %arg1: i32) -> (i32, i32) {
    %c0_i32 = arith.constant 0 : i32
    %c0_i32_0 = arith.constant 0 : i32
    return %c0_i32, %arg1 : i32, i32
  }
  func.func @transform_2(%arg0: i32, %arg1: i32) -> (i32, i32) {
    %c0_i32 = arith.constant 0 : i32
    %c0_i32_0 = arith.constant 0 : i32
    return %c0_i32, %arg1 : i32, i32
  }
  func.func @transform_3(%arg0: i32, %arg1: i32) -> (i32, i32) {
    %c0_i32 = arith.constant 0 : i32
    %c0_i32_0 = arith.constant 0 : i32
    return %arg1, %c0_i32 : i32, i32
  }
  func.func @transform_4(%arg0: i32, %arg1: i32) -> (i32, i32) {
    %c0_i32 = arith.constant 0 : i32
    %c0_i32_0 = arith.constant 0 : i32
    return %c0_i32, %arg0 : i32, i32
  }
  func.func @transform_5(%arg0: i32, %arg1: i32) -> (i32, i32) {
    %c0_i32 = arith.constant 0 : i32
    %c0_i32_0 = arith.constant 0 : i32
    return %c0_i32, %arg0 : i32, i32
  }
  func.func @transform_6(%arg0: i32, %arg1: i32) -> (i32, i32) {
    %c0_i32 = arith.constant 0 : i32
    %c0_i32_0 = arith.constant 0 : i32
    return %c0_i32, %arg0 : i32, i32
  }
  func.func @transform_7(%arg0: i32, %arg1: i32) -> (i32, i32) {
    %c0_i32 = arith.constant 0 : i32
    %c0_i32_0 = arith.constant 0 : i32
    return %c0_i32, %arg0 : i32, i32
  }
  func.func @transform_8(%arg0: i32, %arg1: i32) -> (i32, i32) {
    %c0_i32 = arith.constant 0 : i32
    %c0_i32_0 = arith.constant 0 : i32
    %c0_i32_1 = arith.constant 0 : i32
    return %c0_i32, %c0_i32_0 : i32, i32
  }
  func.func @transform_9(%arg0: i32, %arg1: i32) -> (i32, i32) {
    %c0_i32 = arith.constant 0 : i32
    %c0_i32_0 = arith.constant 0 : i32
    %c0_i32_1 = arith.constant 0 : i32
    return %c0_i32, %c0_i32_0 : i32, i32
  }
  func.func @transform_10(%arg0: i32, %arg1: i32) -> (i32, i32) {
    %c0_i32 = arith.constant 0 : i32
    %c0_i32_0 = arith.constant 0 : i32
    %c0_i32_1 = arith.constant 0 : i32
    return %c0_i32, %c0_i32_0 : i32, i32
  }
  func.func @transform_11(%arg0: i32, %arg1: i32) -> (i32, i32) {
    %c0_i32 = arith.constant 0 : i32
    %c0_i32_0 = arith.constant 0 : i32
    %c0_i32_1 = arith.constant 0 : i32
    return %c0_i32, %c0_i32_0 : i32, i32
  }
  func.func @transform_12(%arg0: i32, %arg1: i32) -> (i32, i32) {
    %c0_i32 = arith.constant 0 : i32
    %c0_i32_0 = arith.constant 0 : i32
    %c0_i32_1 = arith.constant 0 : i32
    return %c0_i32, %c0_i32_0 : i32, i32
  }
  func.func @transform_13(%arg0: i32, %arg1: i32) -> (i32, i32) {
    %c0_i32 = arith.constant 0 : i32
    %c0_i32_0 = arith.constant 0 : i32
    %c0_i32_1 = arith.constant 0 : i32
    return %c0_i32, %c0_i32_0 : i32, i32
  }
  func.func @transform_14(%arg0: i32, %arg1: i32) -> (i32, i32) {
    %c0_i32 = arith.constant 0 : i32
    %c0_i32_0 = arith.constant 0 : i32
    %c0_i32_1 = arith.constant 0 : i32
    return %c0_i32, %c0_i32_0 : i32, i32
  }
  func.func @transform_15(%arg0: i32, %arg1: i32) -> (i32, i32) {
    %c0_i32 = arith.constant 0 : i32
    %c0_i32_0 = arith.constant 0 : i32
    %c0_i32_1 = arith.constant 0 : i32
    return %c0_i32, %c0_i32_0 : i32, i32
  }
  func.func @transform_16(%arg0: i32, %arg1: i32) -> (i32, i32) {
    %c0_i32 = arith.constant 0 : i32
    %c0_i32_0 = arith.constant 0 : i32
    return %c0_i32, %arg0 : i32, i32
  }
}

</mosaic_0001>

<llo_original>
// kernel: tpu_custom_call.1
$region0: #{tpu_custom_call.1}
  #allocation0 [shape = 'u32[]', space=smem, size = 0x4, offset = 0x4, fixed_abs, tag = 'smem constant byte address 0x4 - core index']
  #allocation1 [shape = 'u32[144,128]{1,0:T(1,128)}', space=vmem, size = 0x12000, scoped, tag = 'internal scratch']
  #allocation2 [shape = 'f32[3,128]{1,0:T(4,128)}', space=vmem, size = 0x800, scoped, tag = 'scratch operand']
  #allocation3 [shape = 'f32[1,1]{1,0:T(1,128)S(1)}', space=vmem, size = 0x200, scoped, tag = 'scoped memory for tpu_custom_call.1']
  %s0 = inlined_call_operand.vmem [shape: f32[3,128], index: 0, kind: input, shape index: {}]
  %s1 = inlined_call_operand.vmem [shape: f32[3,128], index: 1, kind: input, shape index: {}]
  %s2 = inlined_call_operand.vmem [shape: f32[2,128], index: 2, kind: input, shape index: {}]
  %s3 = inlined_call_operand.vmem [shape: s32[128,1], index: 3, kind: input, shape index: {}]
  %s4 = inlined_call_operand.vmem [shape: f32[3,128], index: 4, kind: input, shape index: {}]
  %s5 = inlined_call_operand.vmem [shape: f32[3,128], index: 5, kind: input, shape index: {}]
  %s6 = inlined_call_operand.vmem [shape: f32[1,128], index: 6, kind: input, shape index: {}]
  %s7 = inlined_call_operand.vmem [shape: f32[1,128], index: 7, kind: input, shape index: {}]
  %s8 = inlined_call_operand.vmem [shape: f32[32,1], index: 8, kind: input, shape index: {}]
  %s9 = inlined_call_operand.vmem [shape: f32[32,2], index: 9, kind: input, shape index: {}]
  %s10 = inlined_call_operand.vmem [shape: f32[32,1], index: 10, kind: input, shape index: {}]
  %s11 = inlined_call_operand.vmem [shape: f32[32,1], index: 11, kind: input, shape index: {}]
  %s12 = inlined_call_operand.vmem [shape: f32[32,1], index: 12, kind: input, shape index: {}]
  %s13 = inlined_call_operand.vmem [shape: f32[32,1], index: 13, kind: input, shape index: {}]
  %s14 = inlined_call_operand.vmem [shape: f32[32,1], index: 14, kind: input, shape index: {}]
  %s15 = inlined_call_operand.<no memory space> [shape: f32[1,1], index: 15, kind: input, shape index: {}]
  %s16 = inlined_call_operand.hbm [shape: f32[3,128], index: 16, kind: output, shape index: {}]
  %s17 = sld [smem:[#allocation0]]
  $region82: #{tpu_custom_call.1} parent=0
    _
  %s19 = ssub.s32 1, %s17
  %s20 = scalar_select 0, %s19, %s17
  %v21 = vstv %s15
  %22 = vst [vmem:[#allocation3] sm:$0x1] %v21
  $region1: #{tpu_custom_call.1} parent=0
    #allocation4 [shape = 'u8[2048]{0}', space=vmem, size = 0x800, scoped, tag = 'output window, operand 0, single buffered']
    #allocation5 [shape = 's32[1]{0}', space=sflag, size = 0x4, scoped, tag = 'scoped memory for tpu_custom_call.1']
    %23 = vsyncpa [#allocation5], 0
    // Predicated region
    $region2: #{tpu_custom_call.1} parent=1 // pred_check
      _
    $region3: #{tpu_custom_call.1} parent=1 // pred_check_branch
      %25 = sbr.rel (0) target = $region5
    $region4: #{tpu_custom_call.1} parent=1 // pred_region
      _
    $region5: #{tpu_custom_call.1} parent=1 // pred_fallthru
      _
    // Predicated region
    $region6: #{tpu_custom_call.1} parent=1 // pred_check
      _
    $region7: #{tpu_custom_call.1} parent=1 // pred_check_branch
      %27 = sbr.rel (0) target = $region9
    $region8: #{tpu_custom_call.1} parent=1 // pred_region
      _
    $region9: #{tpu_custom_call.1} parent=1 // pred_fallthru
      _
    // Predicated region
    $region10: #{tpu_custom_call.1} parent=1 // pred_check
      _
    $region11: #{tpu_custom_call.1} parent=1 // pred_check_branch
      %29 = sbr.rel (0) target = $region13
    $region12: #{tpu_custom_call.1} parent=1 // pred_region
      _
    $region13: #{tpu_custom_call.1} parent=1 // pred_fallthru
      _
    // Predicated region
    $region14: #{tpu_custom_call.1} parent=1 // pred_check
      _
    $region15: #{tpu_custom_call.1} parent=1 // pred_check_branch
      %31 = sbr.rel (0) target = $region17
    $region16: #{tpu_custom_call.1} parent=1 // pred_region
      _
    $region17: #{tpu_custom_call.1} parent=1 // pred_fallthru
      _
    // Predicated region
    $region18: #{tpu_custom_call.1} parent=1 // pred_check
      _
    $region19: #{tpu_custom_call.1} parent=1 // pred_check_branch
      %33 = sbr.rel (0) target = $region21
    $region20: #{tpu_custom_call.1} parent=1 // pred_region
      _
    $region21: #{tpu_custom_call.1} parent=1 // pred_fallthru
      _
    // Predicated region
    $region22: #{tpu_custom_call.1} parent=1 // pred_check
      _
    $region23: #{tpu_custom_call.1} parent=1 // pred_check_branch
      %35 = sbr.rel (0) target = $region25
    $region24: #{tpu_custom_call.1} parent=1 // pred_region
      _
    $region25: #{tpu_custom_call.1} parent=1 // pred_fallthru
      _
    // Predicated region
    $region26: #{tpu_custom_call.1} parent=1 // pred_check
      _
    $region27: #{tpu_custom_call.1} parent=1 // pred_check_branch
      %37 = sbr.rel (0) target = $region29
    $region28: #{tpu_custom_call.1} parent=1 // pred_region
      _
    $region29: #{tpu_custom_call.1} parent=1 // pred_fallthru
      _
    // Predicated region
    $region30: #{tpu_custom_call.1} parent=1 // pred_check
      _
    $region31: #{tpu_custom_call.1} parent=1 // pred_check_branch
      %39 = sbr.rel (0) target = $region33
    $region32: #{tpu_custom_call.1} parent=1 // pred_region
      _
    $region33: #{tpu_custom_call.1} parent=1 // pred_fallthru
      _
    // Predicated region
    $region34: #{tpu_custom_call.1} parent=1 // pred_check
      _
    $region35: #{tpu_custom_call.1} parent=1 // pred_check_branch
      %41 = sbr.rel (0) target = $region37
    $region36: #{tpu_custom_call.1} parent=1 // pred_region
      _
    $region37: #{tpu_custom_call.1} parent=1 // pred_fallthru
      _
    // Predicated region
    $region38: #{tpu_custom_call.1} parent=1 // pred_check
      _
    $region39: #{tpu_custom_call.1} parent=1 // pred_check_branch
      %43 = sbr.rel (0) target = $region41
    $region40: #{tpu_custom_call.1} parent=1 // pred_region
      _
    $region41: #{tpu_custom_call.1} parent=1 // pred_fallthru
      _
    // Predicated region
    $region42: #{tpu_custom_call.1} parent=1 // pred_check
      _
    $region43: #{tpu_custom_call.1} parent=1 // pred_check_branch
      %45 = sbr.rel (0) target = $region45
    $region44: #{tpu_custom_call.1} parent=1 // pred_region
      _
    $region45: #{tpu_custom_call.1} parent=1 // pred_fallthru
      _
    // Predicated region
    $region46: #{tpu_custom_call.1} parent=1 // pred_check
      _
    $region47: #{tpu_custom_call.1} parent=1 // pred_check_branch
      %47 = sbr.rel (0) target = $region49
    $region48: #{tpu_custom_call.1} parent=1 // pred_region
      _
    $region49: #{tpu_custom_call.1} parent=1 // pred_fallthru
      _
    // Predicated region
    $region50: #{tpu_custom_call.1} parent=1 // pred_check
      _
    $region51: #{tpu_custom_call.1} parent=1 // pred_check_branch
      %49 = sbr.rel (0) target = $region53
    $region52: #{tpu_custom_call.1} parent=1 // pred_region
      _
    $region53: #{tpu_custom_call.1} parent=1 // pred_fallthru
      _
    // Predicated region
    $region54: #{tpu_custom_call.1} parent=1 // pred_check
      _
    $region55: #{tpu_custom_call.1} parent=1 // pred_check_branch
      %51 = sbr.rel (0) target = $region57
    $region56: #{tpu_custom_call.1} parent=1 // pred_region
      _
    $region57: #{tpu_custom_call.1} parent=1 // pred_fallthru
      _
    // Predicated region
    $region58: #{tpu_custom_call.1} parent=1 // pred_check
      _
    $region59: #{tpu_custom_call.1} parent=1 // pred_check_branch
      %53 = sbr.rel (0) target = $region61
    $region60: #{tpu_custom_call.1} parent=1 // pred_region
      _
    $region61: #{tpu_custom_call.1} parent=1 // pred_fallthru
      _
    // Predicated region
    $region62: #{tpu_custom_call.1} parent=1 // pred_check
      _
    $region63: #{tpu_custom_call.1} parent=1 // pred_check_branch
      %55 = sbr.rel (0) target = $region65
    $region64: #{tpu_custom_call.1} parent=1 // pred_region
      _
    $region65: #{tpu_custom_call.1} parent=1 // pred_fallthru
      _
    %p56 = scmp.eq.s32.totalorder 0, 0
    // Predicated region
    $region66: #{tpu_custom_call.1} parent=1 // pred_check
      %p57 = pneg %p56
    $region67: #{tpu_custom_call.1} parent=1 // pred_check_branch
      %59 = sbr.rel (%p57) target = $region69
    $region68: #{tpu_custom_call.1} parent=1 // pred_region
      %60 = vst [vmem:[#allocation2] sm:$0x7] 0.0
    $region69: #{tpu_custom_call.1} parent=1 // pred_fallthru
      _
    %v61 = vld [vmem:[%s0] sm:$0x7]
    %v62 = vld [vmem:[%s1] sm:$0x7]
    %v63 = vsub.f32 %v61, %v62
    %v64 = vmul.f32 %v63, %v63
    %vm65 = vcmask 1042432
    %v66 = vsel %vm65, %v64, 0.0
    %v67 = vrot.slane %v66, 4
    %v68 = vadd.f32 %v66, %v67
    %v69 = vrot.slane %v68, 2
    %v70 = vadd.f32 %v68, %v69
    %v71 = vrot.slane %v70, 1
    %v72 = vadd.f32 %v70, %v71
    %v73 = vrsqrt.pop %v72
    %v74 = vmul.f32 %v72, %v73
    %vm75 = vcmp.eq.f32.partialorder %v72, inf
    %v76 = vsel %vm75, %v72, %v74
    %vm77 = vcmp.eq.f32.partialorder %v72, 0.0
    %v78 = vand.u32 %v72, 2147483648
    %v79 = vsel %vm77, %v78, %v76
    %v80 = vld [vmem:[%s8] sm:$0xff]
    %v81 = vld [vmem:[%s8 + $0x8] sm:$0xff]
    %v82 = vld [vmem:[%s8 + $0x10] sm:$0xff]
    %v83 = vld [vmem:[%s8 + $0x18] sm:$0xff]
    %85 = vset.pattern.permute.xlu0 0
    %86 = vperm.xlu0 %85, %v80
    %v87 = vpop.permute.xlu0 %86
    %90 = vset.pattern.permute.xlu0 0
    %91 = vperm.xlu0 %90, %v81
    %v92 = vpop.permute.xlu0 %91
    %95 = vset.pattern.permute.xlu0 0
    %96 = vperm.xlu0 %95, %v82
    %v97 = vpop.permute.xlu0 %96
    %100 = vset.pattern.permute.xlu0 0
    %101 = vperm.xlu0 %100, %v83
    %v102 = vpop.permute.xlu0 %101
    %v104 = vmul.f32 %v87, %v79
    %v105 = vmul.f32 %v92, %v79
    %v106 = vmul.f32 %v97, %v79
    %v107 = vmul.f32 %v102, %v79
    %v108 = vld [vmem:[%s10] sm:$0xff]
    %v109 = vld [vmem:[%s10 + $0x8] sm:$0xff]
    %v110 = vld [vmem:[%s10 + $0x10] sm:$0xff]
    %v111 = vld [vmem:[%s10 + $0x18] sm:$0xff]
    %113 = vset.pattern.permute.xlu0 0
    %114 = vperm.xlu0 %113, %v108
    %v115 = vpop.permute.xlu0 %114
    %118 = vset.pattern.permute.xlu0 0
    %119 = vperm.xlu0 %118, %v109
    %v120 = vpop.permute.xlu0 %119
    %123 = vset.pattern.permute.xlu0 0
    %124 = vperm.xlu0 %123, %v110
    %v125 = vpop.permute.xlu0 %124
    %128 = vset.pattern.permute.xlu0 0
    %129 = vperm.xlu0 %128, %v111
    %v130 = vpop.permute.xlu0 %129
    %v132 = vadd.f32 %v104, %v115
    %v133 = vadd.f32 %v105, %v120
    %v134 = vadd.f32 %v106, %v125
    %v135 = vadd.f32 %v107, %v130
    %v136 = vld [vmem:[%s9] sm:$0xff]
    %v137 = vld [vmem:[%s9 + $0x8] sm:$0xff]
    %v138 = vld [vmem:[%s9 + $0x10] sm:$0xff]
    %v139 = vld [vmem:[%s9 + $0x18] sm:$0xff]
    %v140 = vld [vmem:[%s2] sm:$0x3]
    %vm141 = vcmask 15360
    %v143 = vsel %vm141, %v136, 0
    %v146 = vsel %vm141, %v137, 0
    %v149 = vsel %vm141, %v138, 0
    %v152 = vsel %vm141, %v139, 0
    %vm154 = vcmask 1041408
    %v156 = vsel %vm154, %v140, 0
    %158 = vmatprep.subr.mxu0 0.0
    %159 = vmatpush1.msra.mxu0 0.0
    %160 = vmatprep.subr.mxu0 0.0
    %161 = vmatpush1.msra.mxu0 0.0
    %162 = vmatprep.subr.mxu0 0.0
    %163 = vmatpush1.msra.mxu0 0.0
    %164 = vmatprep.subr.mxu0 0.0
    %165 = vmatpush1.msra.mxu0 0.0
    %166 = vmatprep.subr.mxu0 0.0
    %167 = vmatpush1.msra.mxu0 0.0
    %168 = vmatprep.subr.mxu0 0.0
    %169 = vmatpush1.msra.mxu0 0.0
    %170 = vmatprep.subr.mxu0 0.0
    %171 = vmatpush1.msra.mxu0 0.0
    %172 = vmatprep.subr.mxu0 0.0
    %173 = vmatpush1.msra.mxu0 0.0
    %174 = vmatprep.subr.mxu0 0.0
    %175 = vmatpush1.msra.mxu0 0.0
    %176 = vmatprep.subr.mxu0 0.0
    %177 = vmatpush1.msra.mxu0 0.0
    %178 = vmatprep.subr.mxu0 0.0
    %179 = vmatpush1.msra.mxu0 0.0
    %180 = vmatprep.subr.mxu0 0.0
    %181 = vmatpush1.msra.mxu0 0.0
    %182 = vmatprep.subr.mxu0 0.0
    %183 = vmatpush1.msra.mxu0 0.0
    %184 = vmatprep.subr.mxu0 0.0
    %185 = vmatpush1.msra.mxu0 0.0
    %186 = vmatprep.subr.mxu0 0.0
    %187 = vmatpush1.msra.mxu0 0.0
    %188 = vmatprep.subr.mxu0 0.0
    %189 = vmatpush1.msra.mxu0 %v156
    %190 = vmatprep.subr.mxu0 0.0
    %191 = vmatpush2.msra.mxu0 0.0
    %192 = vmatprep.subr.mxu0 0.0
    %193 = vmatpush2.msra.mxu0 0.0
    %194 = vmatprep.subr.mxu0 0.0
    %195 = vmatpush2.msra.mxu0 0.0
    %196 = vmatprep.subr.mxu0 0.0
    %197 = vmatpush2.msra.mxu0 0.0
    %198 = vmatprep.subr.mxu0 0.0
    %199 = vmatpush2.msra.mxu0 0.0
    %200 = vmatprep.subr.mxu0 0.0
    %201 = vmatpush2.msra.mxu0 0.0
    %202 = vmatprep.subr.mxu0 0.0
    %203 = vmatpush2.msra.mxu0 0.0
    %204 = vmatprep.subr.mxu0 0.0
    %205 = vmatpush2.msra.mxu0 0.0
    %206 = vmatprep.subr.mxu0 0.0
    %207 = vmatpush2.msra.mxu0 0.0
    %208 = vmatprep.subr.mxu0 0.0
    %209 = vmatpush2.msra.mxu0 0.0
    %210 = vmatprep.subr.mxu0 0.0
    %211 = vmatpush2.msra.mxu0 0.0
    %212 = vmatprep.subr.mxu0 0.0
    %213 = vmatpush2.msra.mxu0 0.0
    %214 = vmatprep.subr.mxu0 0.0
    %215 = vmatpush2.msra.mxu0 0.0
    %216 = vmatprep.subr.mxu0 0.0
    %217 = vmatpush2.msra.mxu0 0.0
    %218 = vmatprep.subr.mxu0 0.0
    %219 = vmatpush2.msra.mxu0 0.0
    %220 = vmatprep.subr.mxu0 0.0
    %221 = vmatpush2.msra.mxu0 0.0
    %222 = vmatprep.mubr.f32.mxu0 0.0
    %223 = vmatmul.mubr.f32.gmra.mxu0 %v143
    %v224 = vpop.f32.mrf.mxu0
    %v225 = vadd.f32 0.0, %v224
    %v226 = vpop.f32.mrf.mxu0
    %227 = vmatprep.mubr.f32.mxu0 0.0
    %228 = vmatmul.mubr.f32.gmra.mxu0 %v146
    %v229 = vpop.f32.mrf.mxu0
    %v230 = vadd.f32 0.0, %v229
    %v231 = vpop.f32.mrf.mxu0
    %232 = vmatprep.mubr.f32.mxu0 0.0
    %233 = vmatmul.mubr.f32.gmra.mxu0 %v149
    %v234 = vpop.f32.mrf.mxu0
    %v235 = vadd.f32 0.0, %v234
    %v236 = vpop.f32.mrf.mxu0
    %237 = vmatprep.mubr.f32.mxu0 0.0
    %238 = vmatmul.mubr.f32.gmra.mxu0 %v152
    %v239 = vpop.f32.mrf.mxu0
    %v240 = vadd.f32 0.0, %v239
    %v241 = vpop.f32.mrf.mxu0
    %242 = vdwg.mxu0
    %v243 = vadd.f32 %v132, %v225
    %v244 = vadd.f32 %v133, %v230
    %v245 = vadd.f32 %v134, %v235
    %v246 = vadd.f32 %v135, %v240
    %vm247 = vcmp.gt.f32.partialorder %v243, 0.0
    %vm248 = vcmp.gt.f32.partialorder %v244, 0.0
    %vm249 = vcmp.gt.f32.partialorder %v245, 0.0
    %vm250 = vcmp.gt.f32.partialorder %v246, 0.0
    %v251 = vmul.f32 %v243, 0.2
    %v252 = vmul.f32 %v244, 0.2
    %v253 = vmul.f32 %v245, 0.2
    %v254 = vmul.f32 %v246, 0.2
    %v255 = vsel %vm247, %v243, %v251
    %v256 = vsel %vm248, %v244, %v252
    %v257 = vsel %vm249, %v245, %v253
    %v258 = vsel %vm250, %v246, %v254
    %v259 = vld [vmem:[%s11] sm:$0xff]
    %v260 = vld [vmem:[%s11 + $0x8] sm:$0xff]
    %v261 = vld [vmem:[%s11 + $0x10] sm:$0xff]
    %v262 = vld [vmem:[%s11 + $0x18] sm:$0xff]
    %264 = vset.pattern.permute.xlu0 0
    %265 = vperm.xlu0 %264, %v259
    %v266 = vpop.permute.xlu0 %265
    %269 = vset.pattern.permute.xlu0 0
    %270 = vperm.xlu0 %269, %v260
    %v271 = vpop.permute.xlu0 %270
    %274 = vset.pattern.permute.xlu0 0
    %275 = vperm.xlu0 %274, %v261
    %v276 = vpop.permute.xlu0 %275
    %279 = vset.pattern.permute.xlu0 0
    %280 = vperm.xlu0 %279, %v262
    %v281 = vpop.permute.xlu0 %280
    %v283 = vmul.f32 %v255, %v266
    %v284 = vmul.f32 %v256, %v271
    %v285 = vmul.f32 %v257, %v276
    %v286 = vmul.f32 %v258, %v281
    %v287 = vadd.f32 %v283, %v284
    %v288 = vadd.f32 %v287, %v285
    %v289 = vadd.f32 %v288, %v286
    %v290 = vrot.slane %v289, 4
    %v291 = vadd.f32 %v289, %v290
    %v292 = vrot.slane %v291, 2
    %v293 = vadd.f32 %v291, %v292
    %v294 = vrot.slane %v293, 1
    %v295 = vadd.f32 %v293, %v294
    %v296 = vtanh.pop %v295
    %v297 = vmul.f32 %v63, %v296
    %v298 = vlaneseq
    %v299 = vand.u32 %v298, 127
    %s300 = smul.u32 0, 128
    %v301 = vstv %s300
    %v302 = vadd.s32 %v299, %v301
    %v303 = vld [vmem:[%s3] sm:$0xff]
    %v304 = vld [vmem:[%s3 + $0x8] sm:$0xff]
    %v305 = vld [vmem:[%s3 + $0x10] sm:$0xff]
    %v306 = vld [vmem:[%s3 + $0x18] sm:$0xff]
    %v307 = vld [vmem:[%s3 + $0x20] sm:$0xff]
    %v308 = vld [vmem:[%s3 + $0x28] sm:$0xff]
    %v309 = vld [vmem:[%s3 + $0x30] sm:$0xff]
    %v310 = vld [vmem:[%s3 + $0x38] sm:$0xff]
    %v311 = vld [vmem:[%s3 + $0x40] sm:$0xff]
    %v312 = vld [vmem:[%s3 + $0x48] sm:$0xff]
    %v313 = vld [vmem:[%s3 + $0x50] sm:$0xff]
    %v314 = vld [vmem:[%s3 + $0x58] sm:$0xff]
    %v315 = vld [vmem:[%s3 + $0x60] sm:$0xff]
    %v316 = vld [vmem:[%s3 + $0x68] sm:$0xff]
    %v317 = vld [vmem:[%s3 + $0x70] sm:$0xff]
    %v318 = vld [vmem:[%s3 + $0x78] sm:$0xff]
    %319 = vset.pattern.permute.xlu0 0
    %320 = vperm.xlu0 %319, %v303
    %v321 = vpop.permute.xlu0 %320
    %322 = vset.pattern.permute.xlu0 0
    %323 = vperm.xlu0 %322, %v304
    %v324 = vpop.permute.xlu0 %323
    %325 = vset.pattern.permute.xlu0 0
    %326 = vperm.xlu0 %325, %v305
    %v327 = vpop.permute.xlu0 %326
    %328 = vset.pattern.permute.xlu0 0
    %329 = vperm.xlu0 %328, %v306
    %v330 = vpop.permute.xlu0 %329
    %331 = vset.pattern.permute.xlu0 0
    %332 = vperm.xlu0 %331, %v307
    %v333 = vpop.permute.xlu0 %332
    %334 = vset.pattern.permute.xlu0 0
    %335 = vperm.xlu0 %334, %v308
    %v336 = vpop.permute.xlu0 %335
    %337 = vset.pattern.permute.xlu0 0
    %338 = vperm.xlu0 %337, %v309
    %v339 = vpop.permute.xlu0 %338
    %340 = vset.pattern.permute.xlu0 0
    %341 = vperm.xlu0 %340, %v310
    %v342 = vpop.permute.xlu0 %341
    %343 = vset.pattern.permute.xlu0 0
    %344 = vperm.xlu0 %343, %v311
    %v345 = vpop.permute.xlu0 %344
    %346 = vset.pattern.permute.xlu0 0
    %347 = vperm.xlu0 %346, %v312
    %v348 = vpop.permute.xlu0 %347
    %349 = vset.pattern.permute.xlu0 0
    %350 = vperm.xlu0 %349, %v313
    %v351 = vpop.permute.xlu0 %350
    %352 = vset.pattern.permute.xlu0 0
    %353 = vperm.xlu0 %352, %v314
    %v354 = vpop.permute.xlu0 %353
    %355 = vset.pattern.permute.xlu0 0
    %356 = vperm.xlu0 %355, %v315
    %v357 = vpop.permute.xlu0 %356
    %358 = vset.pattern.permute.xlu0 0
    %359 = vperm.xlu0 %358, %v316
    %v360 = vpop.permute.xlu0 %359
    %361 = vset.pattern.permute.xlu0 0
    %362 = vperm.xlu0 %361, %v317
    %v363 = vpop.permute.xlu0 %362
    %364 = vset.pattern.permute.xlu0 0
    %365 = vperm.xlu0 %364, %v318
    %v366 = vpop.permute.xlu0 %365
    %vm367 = vcmp.eq.s32.totalorder %v302, %v321
    %vm368 = vcmp.eq.s32.totalorder %v302, %v324
    %vm369 = vcmp.eq.s32.totalorder %v302, %v327
    %vm370 = vcmp.eq.s32.totalorder %v302, %v330
    %vm371 = vcmp.eq.s32.totalorder %v302, %v333
    %vm372 = vcmp.eq.s32.totalorder %v302, %v336
    %vm373 = vcmp.eq.s32.totalorder %v302, %v339
    %vm374 = vcmp.eq.s32.totalorder %v302, %v342
    %vm375 = vcmp.eq.s32.totalorder %v302, %v345
    %vm376 = vcmp.eq.s32.totalorder %v302, %v348
    %vm377 = vcmp.eq.s32.totalorder %v302, %v351
    %vm378 = vcmp.eq.s32.totalorder %v302, %v354
    %vm379 = vcmp.eq.s32.totalorder %v302, %v357
    %vm380 = vcmp.eq.s32.totalorder %v302, %v360
    %vm381 = vcmp.eq.s32.totalorder %v302, %v363
    %vm382 = vcmp.eq.s32.totalorder %v302, %v366
    %v383 = vsel %vm367, 1, 0
    %v384 = vsel %vm368, 1, 0
    %v385 = vsel %vm369, 1, 0
    %v386 = vsel %vm370, 1, 0
    %v387 = vsel %vm371, 1, 0
    %v388 = vsel %vm372, 1, 0
    %v389 = vsel %vm373, 1, 0
    %v390 = vsel %vm374, 1, 0
    %v391 = vsel %vm375, 1, 0
    %v392 = vsel %vm376, 1, 0
    %v393 = vsel %vm377, 1, 0
    %v394 = vsel %vm378, 1, 0
    %v395 = vsel %vm379, 1, 0
    %v396 = vsel %vm380, 1, 0
    %v397 = vsel %vm381, 1, 0
    %v398 = vsel %vm382, 1, 0
    %v399 = vcvt.s32.f32 %v383
    %v400 = vcvt.s32.f32 %v384
    %v401 = vcvt.s32.f32 %v385
    %v402 = vcvt.s32.f32 %v386
    %v403 = vcvt.s32.f32 %v387
    %v404 = vcvt.s32.f32 %v388
    %v405 = vcvt.s32.f32 %v389
    %v406 = vcvt.s32.f32 %v390
    %v407 = vcvt.s32.f32 %v391
    %v408 = vcvt.s32.f32 %v392
    %v409 = vcvt.s32.f32 %v393
    %v410 = vcvt.s32.f32 %v394
    %v411 = vcvt.s32.f32 %v395
    %v412 = vcvt.s32.f32 %v396
    %v413 = vcvt.s32.f32 %v397
    %v414 = vcvt.s32.f32 %v398
    %v415 = vld [vmem:[#allocation2] sm:$0x7]
    %416 = vmatprep.subr.mxu0 0.0
    %417 = vmatpush1.msra.mxu0 %v414
    %418 = vmatprep.subr.mxu0 0.0
    %419 = vmatpush1.msra.mxu0 %v413
    %420 = vmatprep.subr.mxu0 0.0
    %421 = vmatpush1.msra.mxu0 %v412
    %422 = vmatprep.subr.mxu0 0.0
    %423 = vmatpush1.msra.mxu0 %v411
    %424 = vmatprep.subr.mxu0 0.0
    %425 = vmatpush1.msra.mxu0 %v410
    %426 = vmatprep.subr.mxu0 0.0
    %427 = vmatpush1.msra.mxu0 %v409
    %428 = vmatprep.subr.mxu0 0.0
    %429 = vmatpush1.msra.mxu0 %v408
    %430 = vmatprep.subr.mxu0 0.0
    %431 = vmatpush1.msra.mxu0 %v407
    %432 = vmatprep.subr.mxu0 0.0
    %433 = vmatpush1.msra.mxu0 %v406
    %434 = vmatprep.subr.mxu0 0.0
    %435 = vmatpush1.msra.mxu0 %v405
    %436 = vmatprep.subr.mxu0 0.0
    %437 = vmatpush1.msra.mxu0 %v404
    %438 = vmatprep.subr.mxu0 0.0
    %439 = vmatpush1.msra.mxu0 %v403
    %440 = vmatprep.subr.mxu0 0.0
    %441 = vmatpush1.msra.mxu0 %v402
    %442 = vmatprep.subr.mxu0 0.0
    %443 = vmatpush1.msra.mxu0 %v401
    %444 = vmatprep.subr.mxu0 0.0
    %445 = vmatpush1.msra.mxu0 %v400
    %446 = vmatprep.subr.mxu0 0.0
    %447 = vmatpush1.msra.mxu0 %v399
    %448 = vmatprep.subr.mxu0 0.0
    %449 = vmatpush2.msra.mxu0 0.0
    %450 = vmatprep.subr.mxu0 0.0
    %451 = vmatpush2.msra.mxu0 0.0
    %452 = vmatprep.subr.mxu0 0.0
    %453 = vmatpush2.msra.mxu0 0.0
    %454 = vmatprep.subr.mxu0 0.0
    %455 = vmatpush2.msra.mxu0 0.0
    %456 = vmatprep.subr.mxu0 0.0
    %457 = vmatpush2.msra.mxu0 0.0
    %458 = vmatprep.subr.mxu0 0.0
    %459 = vmatpush2.msra.mxu0 0.0
    %460 = vmatprep.subr.mxu0 0.0
    %461 = vmatpush2.msra.mxu0 0.0
    %462 = vmatprep.subr.mxu0 0.0
    %463 = vmatpush2.msra.mxu0 0.0
    %464 = vmatprep.subr.mxu0 0.0
    %465 = vmatpush2.msra.mxu0 0.0
    %466 = vmatprep.subr.mxu0 0.0
    %467 = vmatpush2.msra.mxu0 0.0
    %468 = vmatprep.subr.mxu0 0.0
    %469 = vmatpush2.msra.mxu0 0.0
    %470 = vmatprep.subr.mxu0 0.0
    %471 = vmatpush2.msra.mxu0 0.0
    %472 = vmatprep.subr.mxu0 0.0
    %473 = vmatpush2.msra.mxu0 0.0
    %474 = vmatprep.subr.mxu0 0.0
    %475 = vmatpush2.msra.mxu0 0.0
    %476 = vmatprep.subr.mxu0 0.0
    %477 = vmatpush2.msra.mxu0 0.0
    %478 = vmatprep.subr.mxu0 0.0
    %479 = vmatpush2.msra.mxu0 0.0
    %480 = vmatprep.mubr.f32.mxu0 0.0
    %481 = vmatmul.mubr.f32.gmra.mxu0 %v297
    %v482 = vpop.f32.mrf.mxu0
    %v483 = vadd.f32 0.0, %v482
    %v484 = vpop.f32.mrf.mxu0
    %485 = vdwg.mxu0
    %v486 = vadd.f32 %v415, %v483
    %487 = vst [vmem:[#allocation2] sm:$0x7] %v486
    // Predicated region
    $region70: #{tpu_custom_call.1} parent=1 // pred_check
      %p488 = pneg %p56
    $region71: #{tpu_custom_call.1} parent=1 // pred_check_branch
      %490 = sbr.rel (%p488) target = $region73
    $region72: #{tpu_custom_call.1} parent=1 // pred_region
      %v491 = vld [vmem:[%s7] sm:$0x1]
      %v492 = vmax.f32 %v491, 1.0
      %v493 = vrcp.pop %v492
      %v494 = vmul.f32 1.0, %v493
      %v495 = vld [vmem:[%s4] sm:$0x7]
      %v496 = vld [vmem:[#allocation2] sm:$0x7]
      %v498 = vlaneseq
      %v499 = vshrl.u32 %v498, 7
      %v500 = vsub.s32 0, %v499
      %v501 = vrot.slane %v494, %v500
      %v503 = vmul.f32 %v496, %v501
      %v504 = vadd.f32 %v495, %v503
      %v505 = vld [vmem:[%s12] sm:$0xff]
      %v506 = vld [vmem:[%s12 + $0x8] sm:$0xff]
      %v507 = vld [vmem:[%s12 + $0x10] sm:$0xff]
      %v508 = vld [vmem:[%s12 + $0x18] sm:$0xff]
      %v509 = vld [vmem:[%s6] sm:$0x1]
      %511 = vset.pattern.permute.xlu0 0
      %512 = vperm.xlu0 %511, %v505
      %v513 = vpop.permute.xlu0 %512
      %516 = vset.pattern.permute.xlu0 0
      %517 = vperm.xlu0 %516, %v506
      %v518 = vpop.permute.xlu0 %517
      %521 = vset.pattern.permute.xlu0 0
      %522 = vperm.xlu0 %521, %v507
      %v523 = vpop.permute.xlu0 %522
      %526 = vset.pattern.permute.xlu0 0
      %527 = vperm.xlu0 %526, %v508
      %v528 = vpop.permute.xlu0 %527
      %v531 = vlaneseq
      %v532 = vshrl.u32 %v531, 7
      %v533 = vsub.s32 0, %v532
      %v534 = vrot.slane %v509, %v533
      %v536 = vmul.f32 %v513, %v534
      %v537 = vmul.f32 %v518, %v534
      %v538 = vmul.f32 %v523, %v534
      %v539 = vmul.f32 %v528, %v534
      %v540 = vld [vmem:[%s13] sm:$0xff]
      %v541 = vld [vmem:[%s13 + $0x8] sm:$0xff]
      %v542 = vld [vmem:[%s13 + $0x10] sm:$0xff]
      %v543 = vld [vmem:[%s13 + $0x18] sm:$0xff]
      %545 = vset.pattern.permute.xlu0 0
      %546 = vperm.xlu0 %545, %v540
      %v547 = vpop.permute.xlu0 %546
      %550 = vset.pattern.permute.xlu0 0
      %551 = vperm.xlu0 %550, %v541
      %v552 = vpop.permute.xlu0 %551
      %555 = vset.pattern.permute.xlu0 0
      %556 = vperm.xlu0 %555, %v542
      %v557 = vpop.permute.xlu0 %556
      %560 = vset.pattern.permute.xlu0 0
      %561 = vperm.xlu0 %560, %v543
      %v562 = vpop.permute.xlu0 %561
      %v564 = vadd.f32 %v536, %v547
      %v565 = vadd.f32 %v537, %v552
      %v566 = vadd.f32 %v538, %v557
      %v567 = vadd.f32 %v539, %v562
      %vm568 = vcmp.gt.f32.partialorder %v564, 0.0
      %vm569 = vcmp.gt.f32.partialorder %v565, 0.0
      %vm570 = vcmp.gt.f32.partialorder %v566, 0.0
      %vm571 = vcmp.gt.f32.partialorder %v567, 0.0
      %v572 = vmul.f32 %v564, 0.2
      %v573 = vmul.f32 %v565, 0.2
      %v574 = vmul.f32 %v566, 0.2
      %v575 = vmul.f32 %v567, 0.2
      %v576 = vsel %vm568, %v564, %v572
      %v577 = vsel %vm569, %v565, %v573
      %v578 = vsel %vm570, %v566, %v574
      %v579 = vsel %vm571, %v567, %v575
      %v580 = vld [vmem:[%s14] sm:$0xff]
      %v581 = vld [vmem:[%s14 + $0x8] sm:$0xff]
      %v582 = vld [vmem:[%s14 + $0x10] sm:$0xff]
      %v583 = vld [vmem:[%s14 + $0x18] sm:$0xff]
      %585 = vset.pattern.permute.xlu0 0
      %586 = vperm.xlu0 %585, %v580
      %v587 = vpop.permute.xlu0 %586
      %590 = vset.pattern.permute.xlu0 0
      %591 = vperm.xlu0 %590, %v581
      %v592 = vpop.permute.xlu0 %591
      %595 = vset.pattern.permute.xlu0 0
      %596 = vperm.xlu0 %595, %v582
      %v597 = vpop.permute.xlu0 %596
      %600 = vset.pattern.permute.xlu0 0
      %601 = vperm.xlu0 %600, %v583
      %v602 = vpop.permute.xlu0 %601
      %v604 = vmul.f32 %v576, %v587
      %v605 = vmul.f32 %v577, %v592
      %v606 = vmul.f32 %v578, %v597
      %v607 = vmul.f32 %v579, %v602
      %v608 = vadd.f32 %v604, %v605
      %v609 = vadd.f32 %v608, %v606
      %v610 = vadd.f32 %v609, %v607
      %v611 = vrot.slane %v610, 4
      %v612 = vadd.f32 %v610, %v611
      %v613 = vrot.slane %v612, 2
      %v614 = vadd.f32 %v612, %v613
      %v615 = vrot.slane %v614, 1
      %v616 = vadd.f32 %v614, %v615
      %v617 = vld [vmem:[#allocation3] sm:$0x1]
      %619 = vset.pattern.permute.xlu0 0
      %620 = vperm.xlu0 %619, %v617
      %v621 = vpop.permute.xlu0 %620
      %v623 = vlaneseq
      %v624 = vshrl.u32 %v623, 7
      %v625 = vsub.s32 0, %v624
      %v626 = vrot.slane %v621, %v625
      %v627 = vadd.f32 %v616, %v626
      %v628 = vld [vmem:[%s5] sm:$0x7]
      %v629 = vmul.f32 %v628, %v627
      %v630 = vadd.f32 %v504, %v629
      %631 = vst [vmem:[#allocation4] sm:$0x7] %v630
    $region73: #{tpu_custom_call.1} parent=1 // pred_fallthru
      _
    // Predicated region
    $region74: #{tpu_custom_call.1} parent=1 // pred_check
      _
    $region75: #{tpu_custom_call.1} parent=1 // pred_check_branch
      %633 = sbr.rel (0) target = $region77
    $region76: #{tpu_custom_call.1} parent=1 // pred_region
      %s635 = ssub.s32 64, 64
      %636 = vsyncadd [#allocation5], %s635
      %s638 = sshll.u32 [#allocation4], 4
      %s639 = int_to_ptr.vmem [resolvable:$true] %s638
      %641 = dma.vmem_to_hbm [thread:$0]  %s639, 64, %s16, [#allocation5]
    $region77: #{tpu_custom_call.1} parent=1 // pred_fallthru
      _
    // Predicated region
    $region78: #{tpu_custom_call.1} parent=1 // pred_check
      _
    $region79: #{tpu_custom_call.1} parent=1 // pred_check_branch
      %643 = sbr.rel (0) target = $region81
    $region80: #{tpu_custom_call.1} parent=1 // pred_region
      %644 = dma.done [#allocation5], 64
    $region81: #{tpu_custom_call.1} parent=1 // pred_fallthru
      _
    %645 = vsyncpa [#allocation5], 1

</llo_original>
